<compile_context>
chip_gen: v7x
topology: tpu7x:2x2x1
jax: 0.10.0
libtpu: 0.0.40
codegen_flags: <defaults>
</compile_context>

<pallas_src>
import math
from functools import partial

import jax
import jax.numpy as jnp
from jax.experimental import pallas as pl
from jax.experimental.pallas import tpu as pltpu

_LANE = 128
_SUBLANE = 16          # covers both f32 (8) and bf16 (16) sublane packing
_BN_EPS = 1e-5
_INV_SQRT2 = 1.0 / math.sqrt(2.0)


def _round_up(n, m):
    return ((n + m - 1) // m) * m


def _tpu_budget():
    """Generation-aware (vmem_limit_bytes, default batch tile)."""
    try:
        cap = int(getattr(pltpu.get_tpu_info(), "vmem_capacity_bytes", 64 << 20))
    except Exception:
        cap = 64 << 20
    if cap >= (96 << 20):           # v5e / v6e: 128 MiB VMEM per core
        return 100 << 20, 1024
    return 40 << 20, 512            # v7x: 64 MiB VMEM per TensorCore


# --------------------------------------------------------------------------- #
# Pass 1: Linear1 (no bias, BN cancels it) + per-tile partial BN statistics
# --------------------------------------------------------------------------- #
def _pass1_kernel(x_ref, w1_ref, h_ref, stats_ref):
    # MXU matmul in the input dtype (bf16 when provided), f32 accumulation.
    h = jnp.dot(x_ref[...], w1_ref[...], preferred_element_type=jnp.float32)
    h_ref[...] = h.astype(h_ref.dtype)

    # Per-tile partial statistics.  Batch-padding rows are exact zeros (x is
    # zero-padded and the redundant b1 is dropped), so no masking is required.
    s1 = jnp.sum(h, axis=0, keepdims=True)          # (1, H) sum
    s2 = jnp.sum(h * h, axis=0, keepdims=True)      # (1, H) sum of squares
    stats_ref[...] = jnp.concatenate([s1, s2], axis=0)[None]   # (1, 2, H)


# --------------------------------------------------------------------------- #
# Pass 2: folded BatchNorm (scale/shift) + exact GELU + Linear2
# --------------------------------------------------------------------------- #
def _pass2_kernel(h_ref, scale_ref, shift_ref, w2_ref, b2_ref, o_ref):
    h = h_ref[...].astype(jnp.float32)
    hn = h * scale_ref[...] + shift_ref[...]                     # folded BN

    # Exact (erf) GELU, matching torch.nn.GELU() default.
    g = 0.5 * hn * (1.0 + jax.lax.erf(hn * jnp.float32(_INV_SQRT2)))

    out = jnp.dot(g.astype(w2_ref.dtype), w2_ref[...],
                  preferred_element_type=jnp.float32)
    o_ref[...] = (out + b2_ref[...].astype(jnp.float32)).astype(o_ref.dtype)


# --------------------------------------------------------------------------- #
# Wrapper
# --------------------------------------------------------------------------- #
def mlp_forward(x, w1, b1, gamma, beta, w2, b2, *, block_b=None):
    """x: [B, D_in]; w1: [D_in, H]; w2: [H, D_out]; vectors 1-D.

    b1 is accepted for API parity with the PyTorch module but is not used:
    BatchNorm1d directly after the linear cancels the bias exactly.
    """
    del b1
    B, d_in = x.shape
    h_dim = w1.shape[1]
    d_out = w2.shape[1]
    itemsize = jnp.dtype(x.dtype).itemsize

    vmem_limit, default_block_b = _tpu_budget()
    if block_b is None:
        block_b = default_block_b

    # Feature dims padded to 128 lanes (lane-dense, unmasked vst); batch tile
    # chosen to minimize padding waste.
    dp_in = _round_up(d_in, _LANE)
    hp = _round_up(h_dim, _LANE)
    dp_out = _round_up(d_out, _LANE)
    nb = pl.cdiv(B, block_b)
    tile_b = _round_up(pl.cdiv(B, nb), _SUBLANE)
    b_pad = tile_b * nb

    xp = jnp.pad(x, ((0, b_pad - B), (0, dp_in - d_in)))
    w1p = jnp.pad(w1, ((0, dp_in - d_in), (0, hp - h_dim)))
    gammap = jnp.pad(jnp.reshape(gamma, (1, -1)), ((0, 0), (0, hp - h_dim)))
    betap = jnp.pad(jnp.reshape(beta, (1, -1)), ((0, 0), (0, hp - h_dim)))
    w2p = jnp.pad(w2, ((0, hp - h_dim), (0, dp_out - d_out)))
    b2p = jnp.pad(jnp.reshape(b2, (1, -1)), ((0, 0), (0, dp_out - d_out)))

    h_dtype = x.dtype   # stream the intermediate in the input dtype (bf16-able)

    # ---- Pass 1: Linear1 + per-tile partial BN stats (fully parallel) ----
    h, partial_stats = pl.pallas_call(
        _pass1_kernel,
        out_shape=(
            jax.ShapeDtypeStruct((b_pad, hp), h_dtype),      # h intermediate
            jax.ShapeDtypeStruct((nb, 2, hp), jnp.float32),  # per-tile [sum; sumsq]
        ),
        grid=(nb,),
        in_specs=[
            pl.BlockSpec((tile_b, dp_in), lambda i: (i, 0)),   # streamed x tile
            pl.BlockSpec((dp_in, hp), lambda i: (0, 0)),       # resident W1
        ],
        out_specs=(
            pl.BlockSpec((tile_b, hp), lambda i: (i, 0)),      # streamed h tile
            pl.BlockSpec((1, 2, hp), lambda i: (i, 0, 0)),     # per-tile stats
        ),
        compiler_params=pltpu.CompilerParams(
            dimension_semantics=("parallel",),                 # megacore on v7x
            vmem_limit_bytes=vmem_limit,
        ),
        cost_estimate=pl.CostEstimate(
            flops=2 * b_pad * dp_in * hp,
            transcendentals=0,
            bytes_accessed=(b_pad * dp_in + dp_in * hp) * itemsize
            + b_pad * hp * jnp.dtype(h_dtype).itemsize + nb * 2 * hp * 4,
        ),
    )(xp, w1p)

    # ---- Tiny XLA reduction + BN scale/shift folding (once per call) ----
    sums = jnp.sum(partial_stats, axis=0)                       # (2, hp) f32
    inv_n = jnp.float32(1.0 / B)
    mean = sums[0:1, :] * inv_n
    var = jnp.maximum(sums[1:2, :] * inv_n - mean * mean, 0.0)  # biased variance
    inv_std = jax.lax.rsqrt(var + jnp.float32(_BN_EPS))
    scale = gammap.astype(jnp.float32) * inv_std                # (1, hp)
    shift = betap.astype(jnp.float32) - mean * scale            # (1, hp)

    # ---- Pass 2: folded BN + GELU + Linear2 (parallel over batch tiles) ----
    outp = pl.pallas_call(
        _pass2_kernel,
        out_shape=jax.ShapeDtypeStruct((b_pad, dp_out), x.dtype),
        grid=(nb,),
        in_specs=[
            pl.BlockSpec((tile_b, hp), lambda i: (i, 0)),      # streamed h tile
            pl.BlockSpec((1, hp), lambda i: (0, 0)),           # resident scale
            pl.BlockSpec((1, hp), lambda i: (0, 0)),           # resident shift
            pl.BlockSpec((hp, dp_out), lambda i: (0, 0)),      # resident W2
            pl.BlockSpec((1, dp_out), lambda i: (0, 0)),       # resident b2
        ],
        out_specs=pl.BlockSpec((tile_b, dp_out), lambda i: (i, 0)),
        compiler_params=pltpu.CompilerParams(
            dimension_semantics=("parallel",),
            vmem_limit_bytes=vmem_limit,
        ),
        cost_estimate=pl.CostEstimate(
            flops=2 * b_pad * hp * dp_out + 8 * b_pad * hp,
            transcendentals=b_pad * hp,                        # erf
            bytes_accessed=b_pad * hp * jnp.dtype(h_dtype).itemsize
            + (2 * hp) * 4 + (hp * dp_out + dp_out) * itemsize
            + b_pad * dp_out * itemsize,
        ),
    )(h, scale, shift, w2p, b2p)

    return outp[:B, :d_out]


mlp_forward_jit = jax.jit(mlp_forward, static_argnames=("block_b",))


def init_params(key, input_dim, hidden_dim, output_dim):
    """Init mirroring PyTorch defaults (uniform +/- 1/sqrt(fan_in))."""
    k1, k2, k3, k4 = jax.random.split(key, 4)
    bound1 = 1.0 / math.sqrt(input_dim)
    bound2 = 1.0 / math.sqrt(hidden_dim)
    w1 = jax.random.uniform(k1, (input_dim, hidden_dim), jnp.float32, -bound1, bound1)
    b1 = jax.random.uniform(k2, (hidden_dim,), jnp.float32, -bound1, bound1)
    gamma = jnp.ones((hidden_dim,), jnp.float32)
    beta = jnp.zeros((hidden_dim,), jnp.float32)
    w2 = jax.random.uniform(k3, (hidden_dim, output_dim), jnp.float32, -bound2, bound2)
    b2 = jax.random.uniform(k4, (output_dim,), jnp.float32, -bound2, bound2)
    return w1, b1, gamma, beta, w2, b2


def _reference(x, w1, b1, gamma, beta, w2, b2):
    """Plain JAX reference (PyTorch BatchNorm1d training semantics, exact GELU)."""
    h = x @ w1 + b1
    mu = h.mean(axis=0, keepdims=True)
    var = ((h - mu) ** 2).mean(axis=0, keepdims=True)   # biased variance
    hn = (h - mu) / jnp.sqrt(var + _BN_EPS) * gamma + beta
    g = 0.5 * hn * (1.0 + jax.lax.erf(hn / jnp.sqrt(2.0)))
    return g @ w2 + b2


if __name__ == "__main__":
    # Small shapes: batch=8, input_dim=32, hidden_dim=64, output_dim=16
    B, D_IN, D_HID, D_OUT = 8, 32, 64, 16

    key = jax.random.PRNGKey(0)
    kx, kp = jax.random.split(key)
    x = jax.random.normal(kx, (B, D_IN), jnp.float32)
    w1, b1, gamma, beta, w2, b2 = init_params(kp, D_IN, D_HID, D_OUT)

    ref = _reference(x, w1, b1, gamma, beta, w2, b2)

    # f32 path (tight tolerance, matches the module's default precision).
    out = mlp_forward_jit(x, w1, b1, gamma, beta, w2, b2)
    jax.block_until_ready(out)
    assert out.shape == ref.shape, "shape mismatch vs reference"
    assert jnp.allclose(out, ref, atol=1e-3, rtol=1e-3), "f32 mismatch vs reference"

    # bf16 path (MXU operands + h intermediate streamed in bf16; loose tolerance).
    out_bf16 = mlp_forward_jit(
        x.astype(jnp.bfloat16), w1.astype(jnp.bfloat16), b1, gamma, beta,
        w2.astype(jnp.bfloat16), b2)
    jax.block_until_ready(out_bf16)
    assert jnp.allclose(out_bf16.astype(jnp.float32), ref, atol=1e-1, rtol=1e-1), \
        "bf16 mismatch vs reference"

    print("KERNEL_OK")
</pallas_src>

<mosaic_0001>
module attributes {stable_mosaic.version = 11 : i64} {
  func.func @_pass1_kernel(%arg0: i32, %arg1: memref<16x128xf32, #tpu.memory_space<vmem>>, %arg2: memref<128x128xf32, #tpu.memory_space<vmem>>, %arg3: memref<16x128xf32, #tpu.memory_space<vmem>>, %arg4: memref<1x2x128xf32, #tpu.memory_space<vmem>>) attributes {dimension_semantics = [#tpu.dimension_semantics<parallel>], iteration_bounds = array<i64: 1>, scalar_prefetch = 0 : i64, scratch_operands = 0 : i64, tpu.core_type = #tpu.core_type<tc>, window_params = [{transform_indices = @transform_0, window_bounds = array<i64: 16, 128>}, {pipeline_mode = #tpu.pipeline_mode<synchronous>, transform_indices = @transform_1, window_bounds = array<i64: 128, 128>}, {transform_indices = @transform_2, window_bounds = array<i64: 16, 128>}, {transform_indices = @transform_3, window_bounds = array<i64: 1, 2, 128>}]} {
    %c0 = arith.constant 0 : index
    %c0_0 = arith.constant 0 : index
    %0 = vector.load %arg1[%c0, %c0_0] : memref<16x128xf32, #tpu.memory_space<vmem>>, vector<16x128xf32>
    %c0_1 = arith.constant 0 : index
    %c0_2 = arith.constant 0 : index
    %1 = vector.load %arg2[%c0_1, %c0_2] : memref<128x128xf32, #tpu.memory_space<vmem>>, vector<128x128xf32>
    %cst = arith.constant dense<0.000000e+00> : vector<16x128xf32>
    %2 = tpu.matmul %0, %1, %cst {dimension_numbers = #tpu.dot_dimension_numbers<[1], [0], [0], [1], [0, 0, 1, 1], [], []>} : vector<16x128xf32>, vector<128x128xf32>, vector<16x128xf32> -> vector<16x128xf32>
    %c0_3 = arith.constant 0 : index
    %c0_4 = arith.constant 0 : index
    %3 = vector.load %arg3[%c0_3, %c0_4] : memref<16x128xf32, #tpu.memory_space<vmem>>, vector<16x128xf32>
    tpu.vector_store %arg3[%c0_3, %c0_4], %2 {strides = array<i32>} : memref<16x128xf32, #tpu.memory_space<vmem>>, vector<16x128xf32>,
    %cst_5 = arith.constant dense<0.000000e+00> : vector<128xf32>
    %4 = vector.multi_reduction <add>, %2, %cst_5 [0] : vector<16x128xf32> to vector<128xf32>
    %5 = vector.shape_cast %4 : vector<128xf32> to vector<1x128xf32>
    %6 = arith.mulf %2, %2 : vector<16x128xf32>
    %cst_6 = arith.constant dense<0.000000e+00> : vector<128xf32>
    %7 = vector.multi_reduction <add>, %6, %cst_6 [0] : vector<16x128xf32> to vector<128xf32>
    %8 = vector.shape_cast %7 : vector<128xf32> to vector<1x128xf32>
    %9 = tpu.concatenate %5, %8 in 0 : vector<1x128xf32>, vector<1x128xf32> -> vector<2x128xf32>
    %10 = vector.shape_cast %9 : vector<2x128xf32> to vector<1x2x128xf32>
    %c0_7 = arith.constant 0 : index
    %c0_8 = arith.constant 0 : index
    %c0_9 = arith.constant 0 : index
    %11 = vector.load %arg4[%c0_7, %c0_8, %c0_9] : memref<1x2x128xf32, #tpu.memory_space<vmem>>, vector<1x2x128xf32>
    tpu.vector_store %arg4[%c0_7, %c0_8, %c0_9], %10 {strides = array<i32>} : memref<1x2x128xf32, #tpu.memory_space<vmem>>, vector<1x2x128xf32>,
    return
  }
  func.func @transform_0(%arg0: i32) -> (i32, i32) {
    %c0_i32 = arith.constant 0 : i32
    %c0_i32_0 = arith.constant 0 : i32
    return %arg0, %c0_i32 : i32, i32
  }
  func.func @transform_1(%arg0: i32) -> (i32, i32) {
    %c0_i32 = arith.constant 0 : i32
    %c0_i32_0 = arith.constant 0 : i32
    %c0_i32_1 = arith.constant 0 : i32
    return %c0_i32, %c0_i32_0 : i32, i32
  }
  func.func @transform_2(%arg0: i32) -> (i32, i32) {
    %c0_i32 = arith.constant 0 : i32
    %c0_i32_0 = arith.constant 0 : i32
    return %arg0, %c0_i32 : i32, i32
  }
  func.func @transform_3(%arg0: i32) -> (i32, i32, i32) {
    %c0_i32 = arith.constant 0 : i32
    %c0_i32_0 = arith.constant 0 : i32
    %c0_i32_1 = arith.constant 0 : i32
    return %arg0, %c0_i32, %c0_i32_0 : i32, i32, i32
  }
}

module attributes {stable_mosaic.version = 11 : i64} {
  func.func @_pass2_kernel(%arg0: i32, %arg1: memref<16x128xf32, #tpu.memory_space<vmem>>, %arg2: memref<1x128xf32, #tpu.memory_space<vmem>>, %arg3: memref<1x128xf32, #tpu.memory_space<vmem>>, %arg4: memref<128x128xf32, #tpu.memory_space<vmem>>, %arg5: memref<1x128xf32, #tpu.memory_space<vmem>>, %arg6: memref<16x128xf32, #tpu.memory_space<vmem>>) attributes {dimension_semantics = [#tpu.dimension_semantics<parallel>], iteration_bounds = array<i64: 1>, scalar_prefetch = 0 : i64, scratch_operands = 0 : i64, tpu.core_type = #tpu.core_type<tc>, window_params = [{transform_indices = @transform_0, window_bounds = array<i64: 16, 128>}, {pipeline_mode = #tpu.pipeline_mode<synchronous>, transform_indices = @transform_1, window_bounds = array<i64: 1, 128>}, {pipeline_mode = #tpu.pipeline_mode<synchronous>, transform_indices = @transform_2, window_bounds = array<i64: 1, 128>}, {pipeline_mode = #tpu.pipeline_mode<synchronous>, transform_indices = @transform_3, window_bounds = array<i64: 128, 128>}, {pipeline_mode = #tpu.pipeline_mode<synchronous>, transform_indices = @transform_4, window_bounds = array<i64: 1, 128>}, {transform_indices = @transform_5, window_bounds = array<i64: 16, 128>}]} {
    %c0 = arith.constant 0 : index
    %c0_0 = arith.constant 0 : index
    %0 = vector.load %arg1[%c0, %c0_0] : memref<16x128xf32, #tpu.memory_space<vmem>>, vector<16x128xf32>
    %c0_1 = arith.constant 0 : index
    %c0_2 = arith.constant 0 : index
    %1 = vector.load %arg2[%c0_1, %c0_2] : memref<1x128xf32, #tpu.memory_space<vmem>>, vector<1x128xf32>
    %2 = vector.broadcast %1 : vector<1x128xf32> to vector<16x128xf32>
    %3 = arith.mulf %0, %2 : vector<16x128xf32>
    %c0_3 = arith.constant 0 : index
    %c0_4 = arith.constant 0 : index
    %4 = vector.load %arg3[%c0_3, %c0_4] : memref<1x128xf32, #tpu.memory_space<vmem>>, vector<1x128xf32>
    %5 = vector.broadcast %4 : vector<1x128xf32> to vector<16x128xf32>
    %6 = arith.addf %3, %5 : vector<16x128xf32>
    %cst = arith.constant 5.000000e-01 : f32
    %7 = vector.broadcast %cst : f32 to vector<16x128xf32>
    %8 = arith.mulf %7, %6 : vector<16x128xf32>
    %cst_5 = arith.constant 0.707106769 : f32
    %9 = vector.broadcast %cst_5 : f32 to vector<16x128xf32>
    %10 = arith.mulf %6, %9 : vector<16x128xf32>
    %11 = math.erf %10 : vector<16x128xf32>
    %cst_6 = arith.constant 1.000000e+00 : f32
    %12 = vector.broadcast %cst_6 : f32 to vector<16x128xf32>
    %13 = arith.addf %12, %11 : vector<16x128xf32>
    %14 = arith.mulf %8, %13 : vector<16x128xf32>
    %c0_7 = arith.constant 0 : index
    %c0_8 = arith.constant 0 : index
    %15 = vector.load %arg4[%c0_7, %c0_8] : memref<128x128xf32, #tpu.memory_space<vmem>>, vector<128x128xf32>
    %cst_9 = arith.constant dense<0.000000e+00> : vector<16x128xf32>
    %16 = tpu.matmul %14, %15, %cst_9 {dimension_numbers = #tpu.dot_dimension_numbers<[1], [0], [0], [1], [0, 0, 1, 1], [], []>} : vector<16x128xf32>, vector<128x128xf32>, vector<16x128xf32> -> vector<16x128xf32>
    %c0_10 = arith.constant 0 : index
    %c0_11 = arith.constant 0 : index
    %17 = vector.load %arg5[%c0_10, %c0_11] : memref<1x128xf32, #tpu.memory_space<vmem>>, vector<1x128xf32>
    %18 = vector.broadcast %17 : vector<1x128xf32> to vector<16x128xf32>
    %19 = arith.addf %16, %18 : vector<16x128xf32>
    %c0_12 = arith.constant 0 : index
    %c0_13 = arith.constant 0 : index
    %20 = vector.load %arg6[%c0_12, %c0_13] : memref<16x128xf32, #tpu.memory_space<vmem>>, vector<16x128xf32>
    tpu.vector_store %arg6[%c0_12, %c0_13], %19 {strides = array<i32>} : memref<16x128xf32, #tpu.memory_space<vmem>>, vector<16x128xf32>,
    return
  }
  func.func @transform_0(%arg0: i32) -> (i32, i32) {
    %c0_i32 = arith.constant 0 : i32
    %c0_i32_0 = arith.constant 0 : i32
    return %arg0, %c0_i32 : i32, i32
  }
  func.func @transform_1(%arg0: i32) -> (i32, i32) {
    %c0_i32 = arith.constant 0 : i32
    %c0_i32_0 = arith.constant 0 : i32
    %c0_i32_1 = arith.constant 0 : i32
    return %c0_i32, %c0_i32_0 : i32, i32
  }
  func.func @transform_2(%arg0: i32) -> (i32, i32) {
    %c0_i32 = arith.constant 0 : i32
    %c0_i32_0 = arith.constant 0 : i32
    %c0_i32_1 = arith.constant 0 : i32
    return %c0_i32, %c0_i32_0 : i32, i32
  }
  func.func @transform_3(%arg0: i32) -> (i32, i32) {
    %c0_i32 = arith.constant 0 : i32
    %c0_i32_0 = arith.constant 0 : i32
    %c0_i32_1 = arith.constant 0 : i32
    return %c0_i32, %c0_i32_0 : i32, i32
  }
  func.func @transform_4(%arg0: i32) -> (i32, i32) {
    %c0_i32 = arith.constant 0 : i32
    %c0_i32_0 = arith.constant 0 : i32
    %c0_i32_1 = arith.constant 0 : i32
    return %c0_i32, %c0_i32_0 : i32, i32
  }
  func.func @transform_5(%arg0: i32) -> (i32, i32) {
    %c0_i32 = arith.constant 0 : i32
    %c0_i32_0 = arith.constant 0 : i32
    return %arg0, %c0_i32 : i32, i32
  }
}

</mosaic_0001>

<llo_original>
// kernel: mlp_forward.2
$region0: #{mlp_forward.2}
  #allocation0 [shape = 'u32[]', space=smem, size = 0x4, offset = 0x4, fixed_abs, tag = 'smem constant byte address 0x4 - core index']
  #allocation1 [shape = 'u32[144,128]{1,0:T(1,128)}', space=vmem, size = 0x12000, scoped, tag = 'internal scratch']
  %s0 = inlined_call_operand.vmem [shape: f32[16,128], index: 0, kind: input, shape index: {}]
  %s1 = inlined_call_operand.vmem [shape: f32[128,128], index: 1, kind: input, shape index: {}]
  %s2 = inlined_call_operand.vmem [shape: f32[16,128], index: 2, kind: output, shape index: {0}]
  %s3 = inlined_call_operand.vmem [shape: f32[1,2,128], index: 3, kind: output, shape index: {1}]
  %4 = xla_tuple %s2, %s3
  %s5 = sld [smem:[#allocation0]]
  $region26: #{mlp_forward.2} parent=0
    _
  %s7 = ssub.s32 1, %s5
  %s8 = scalar_select 0, %s7, %s5
  // Predicated region
  $region2: #{mlp_forward.2} parent=0 // pred_check
    _
  $region3: #{mlp_forward.2} parent=0 // pred_check_branch
    %10 = sbr.rel (0) target = $region5
  $region4: #{mlp_forward.2} parent=0 // pred_region
    _
  $region5: #{mlp_forward.2} parent=0 // pred_fallthru
    _
  // Predicated region
  $region6: #{mlp_forward.2} parent=0 // pred_check
    _
  $region7: #{mlp_forward.2} parent=0 // pred_check_branch
    %12 = sbr.rel (0) target = $region9
  $region8: #{mlp_forward.2} parent=0 // pred_region
    _
  $region9: #{mlp_forward.2} parent=0 // pred_fallthru
    _
  %v13 = vld [vmem:[%s0] sm:$0xff]
  %v14 = vld [vmem:[%s0 + $0x8] sm:$0xff]
  %v15 = vld [vmem:[%s1] sm:$0xff]
  %v16 = vld [vmem:[%s1 + $0x8] sm:$0xff]
  %v17 = vld [vmem:[%s1 + $0x10] sm:$0xff]
  %v18 = vld [vmem:[%s1 + $0x18] sm:$0xff]
  %v19 = vld [vmem:[%s1 + $0x20] sm:$0xff]
  %v20 = vld [vmem:[%s1 + $0x28] sm:$0xff]
  %v21 = vld [vmem:[%s1 + $0x30] sm:$0xff]
  %v22 = vld [vmem:[%s1 + $0x38] sm:$0xff]
  %v23 = vld [vmem:[%s1 + $0x40] sm:$0xff]
  %v24 = vld [vmem:[%s1 + $0x48] sm:$0xff]
  %v25 = vld [vmem:[%s1 + $0x50] sm:$0xff]
  %v26 = vld [vmem:[%s1 + $0x58] sm:$0xff]
  %v27 = vld [vmem:[%s1 + $0x60] sm:$0xff]
  %v28 = vld [vmem:[%s1 + $0x68] sm:$0xff]
  %v29 = vld [vmem:[%s1 + $0x70] sm:$0xff]
  %v30 = vld [vmem:[%s1 + $0x78] sm:$0xff]
  %31 = vmatprep.subr.mxu0 0.0
  %32 = vmatpush1.msra.mxu0 %v15
  %33 = vmatprep.subr.mxu0 0.0
  %34 = vmatpush1.msra.mxu0 %v16
  %35 = vmatprep.subr.mxu0 0.0
  %36 = vmatpush1.msra.mxu0 %v17
  %37 = vmatprep.subr.mxu0 0.0
  %38 = vmatpush1.msra.mxu0 %v18
  %39 = vmatprep.subr.mxu0 0.0
  %40 = vmatpush1.msra.mxu0 %v19
  %41 = vmatprep.subr.mxu0 0.0
  %42 = vmatpush1.msra.mxu0 %v20
  %43 = vmatprep.subr.mxu0 0.0
  %44 = vmatpush1.msra.mxu0 %v21
  %45 = vmatprep.subr.mxu0 0.0
  %46 = vmatpush1.msra.mxu0 %v22
  %47 = vmatprep.subr.mxu0 0.0
  %48 = vmatpush1.msra.mxu0 %v23
  %49 = vmatprep.subr.mxu0 0.0
  %50 = vmatpush1.msra.mxu0 %v24
  %51 = vmatprep.subr.mxu0 0.0
  %52 = vmatpush1.msra.mxu0 %v25
  %53 = vmatprep.subr.mxu0 0.0
  %54 = vmatpush1.msra.mxu0 %v26
  %55 = vmatprep.subr.mxu0 0.0
  %56 = vmatpush1.msra.mxu0 %v27
  %57 = vmatprep.subr.mxu0 0.0
  %58 = vmatpush1.msra.mxu0 %v28
  %59 = vmatprep.subr.mxu0 0.0
  %60 = vmatpush1.msra.mxu0 %v29
  %61 = vmatprep.subr.mxu0 0.0
  %62 = vmatpush1.msra.mxu0 %v30
  %63 = vmatprep.subr.mxu0 0.0
  %64 = vmatpush1.msra.mxu0 0.0
  %65 = vmatprep.subr.mxu0 0.0
  %66 = vmatpush1.msra.mxu0 0.0
  %67 = vmatprep.subr.mxu0 0.0
  %68 = vmatpush1.msra.mxu0 0.0
  %69 = vmatprep.subr.mxu0 0.0
  %70 = vmatpush1.msra.mxu0 0.0
  %71 = vmatprep.subr.mxu0 0.0
  %72 = vmatpush1.msra.mxu0 0.0
  %73 = vmatprep.subr.mxu0 0.0
  %74 = vmatpush1.msra.mxu0 0.0
  %75 = vmatprep.subr.mxu0 0.0
  %76 = vmatpush1.msra.mxu0 0.0
  %77 = vmatprep.subr.mxu0 0.0
  %78 = vmatpush1.msra.mxu0 0.0
  %79 = vmatprep.subr.mxu0 0.0
  %80 = vmatpush1.msra.mxu0 0.0
  %81 = vmatprep.subr.mxu0 0.0
  %82 = vmatpush1.msra.mxu0 0.0
  %83 = vmatprep.subr.mxu0 0.0
  %84 = vmatpush1.msra.mxu0 0.0
  %85 = vmatprep.subr.mxu0 0.0
  %86 = vmatpush1.msra.mxu0 0.0
  %87 = vmatprep.subr.mxu0 0.0
  %88 = vmatpush1.msra.mxu0 0.0
  %89 = vmatprep.subr.mxu0 0.0
  %90 = vmatpush1.msra.mxu0 0.0
  %91 = vmatprep.subr.mxu0 0.0
  %92 = vmatpush1.msra.mxu0 0.0
  %93 = vmatprep.subr.mxu0 0.0
  %94 = vmatpush1.msra.mxu0 0.0
  %95 = vmatprep.mubr.f32.mxu0 0.0
  %96 = vmatmul.mubr.f32.gmra.mrb[0].mxu0 %v13
  %v97 = vpop.f32.mrb[0].mxu0
  %v98 = vadd.f32 0.0, %v97
  %v99 = vpop.f32.mrb[0].mxu0
  %100 = vmatprep.mubr.f32.mxu0 0.0
  %101 = vmatmul.mubr.f32.gmra.mrb[0].mxu0 %v14
  %v102 = vpop.f32.mrb[0].mxu0
  %v103 = vadd.f32 0.0, %v102
  %v104 = vpop.f32.mrb[0].mxu0
  %105 = vdwg.mxu0
  %106 = vst [vmem:[%s2] sm:$0xff] %v98
  %107 = vst [vmem:[%s2 + $0x8] sm:$0xff] %v103
  %v108 = vadd.f32 %v98, %v103
  %v109 = vrot.slane %v108, 4
  %v110 = vadd.f32 %v108, %v109
  %v111 = vrot.slane %v110, 2
  %v112 = vadd.f32 %v110, %v111
  %v113 = vrot.slane %v112, 1
  %v114 = vadd.f32 %v112, %v113
  %v115 = vmul.f32 %v98, %v98
  %v116 = vmul.f32 %v103, %v103
  %v117 = vadd.f32 %v115, %v116
  %v118 = vrot.slane %v117, 4
  %v119 = vadd.f32 %v117, %v118
  %v120 = vrot.slane %v119, 2
  %v121 = vadd.f32 %v119, %v120
  %v122 = vrot.slane %v121, 1
  %v123 = vadd.f32 %v121, %v122
  %vm124 = vcmask 1040384
  %v125 = vsel %vm124, %v114, %v123
  %126 = vst [vmem:[%s3] sm:$0x3] %v125
  // Predicated region
  $region10: #{mlp_forward.2} parent=0 // pred_check
    _
  $region11: #{mlp_forward.2} parent=0 // pred_check_branch
    %128 = sbr.rel (0) target = $region13
  $region12: #{mlp_forward.2} parent=0 // pred_region
    _
  $region13: #{mlp_forward.2} parent=0 // pred_fallthru
    _
  // Predicated region
  $region14: #{mlp_forward.2} parent=0 // pred_check
    _
  $region15: #{mlp_forward.2} parent=0 // pred_check_branch
    %130 = sbr.rel (0) target = $region17
  $region16: #{mlp_forward.2} parent=0 // pred_region
    _
  $region17: #{mlp_forward.2} parent=0 // pred_fallthru
    _
  // Predicated region
  $region18: #{mlp_forward.2} parent=0 // pred_check
    _
  $region19: #{mlp_forward.2} parent=0 // pred_check_branch
    %132 = sbr.rel (0) target = $region21
  $region20: #{mlp_forward.2} parent=0 // pred_region
    _
  $region21: #{mlp_forward.2} parent=0 // pred_fallthru
    _
  // Predicated region
  $region22: #{mlp_forward.2} parent=0 // pred_check
    _
  $region23: #{mlp_forward.2} parent=0 // pred_check_branch
    %134 = sbr.rel (0) target = $region25
  $region24: #{mlp_forward.2} parent=0 // pred_region
    _
  $region25: #{mlp_forward.2} parent=0 // pred_fallthru
    _

// kernel: mlp_forward.3
$region0: #{mlp_forward.3}
  #allocation0 [shape = 'u32[]', space=smem, size = 0x4, offset = 0x4, fixed_abs, tag = 'smem constant byte address 0x4 - core index']
  #allocation1 [shape = 'u32[144,128]{1,0:T(1,128)}', space=vmem, size = 0x12000, scoped, tag = 'internal scratch']
  %s0 = inlined_call_operand.vmem [shape: f32[16,128], index: 0, kind: input, shape index: {}]
  %s1 = inlined_call_operand.vmem [shape: f32[1,128], index: 1, kind: input, shape index: {}]
  %s2 = inlined_call_operand.vmem [shape: f32[1,128], index: 2, kind: input, shape index: {}]
  %s3 = inlined_call_operand.vmem [shape: f32[128,128], index: 3, kind: input, shape index: {}]
  %s4 = inlined_call_operand.vmem [shape: f32[1,128], index: 4, kind: input, shape index: {}]
  %s5 = inlined_call_operand.vmem [shape: f32[16,128], index: 5, kind: output, shape index: {}]
  %s6 = sld [smem:[#allocation0]]
  $region30: #{mlp_forward.3} parent=0
    _
  %s8 = ssub.s32 1, %s6
  %s9 = scalar_select 0, %s8, %s6
  // Predicated region
  $region2: #{mlp_forward.3} parent=0 // pred_check
    _
  $region3: #{mlp_forward.3} parent=0 // pred_check_branch
    %11 = sbr.rel (0) target = $region5
  $region4: #{mlp_forward.3} parent=0 // pred_region
    _
  $region5: #{mlp_forward.3} parent=0 // pred_fallthru
    _
  // Predicated region
  $region6: #{mlp_forward.3} parent=0 // pred_check
    _
  $region7: #{mlp_forward.3} parent=0 // pred_check_branch
    %13 = sbr.rel (0) target = $region9
  $region8: #{mlp_forward.3} parent=0 // pred_region
    _
  $region9: #{mlp_forward.3} parent=0 // pred_fallthru
    _
  // Predicated region
  $region10: #{mlp_forward.3} parent=0 // pred_check
    _
  $region11: #{mlp_forward.3} parent=0 // pred_check_branch
    %15 = sbr.rel (0) target = $region13
  $region12: #{mlp_forward.3} parent=0 // pred_region
    _
  $region13: #{mlp_forward.3} parent=0 // pred_fallthru
    _
  // Predicated region
  $region14: #{mlp_forward.3} parent=0 // pred_check
    _
  $region15: #{mlp_forward.3} parent=0 // pred_check_branch
    %17 = sbr.rel (0) target = $region17
  $region16: #{mlp_forward.3} parent=0 // pred_region
    _
  $region17: #{mlp_forward.3} parent=0 // pred_fallthru
    _
  // Predicated region
  $region18: #{mlp_forward.3} parent=0 // pred_check
    _
  $region19: #{mlp_forward.3} parent=0 // pred_check_branch
    %19 = sbr.rel (0) target = $region21
  $region20: #{mlp_forward.3} parent=0 // pred_region
    _
  $region21: #{mlp_forward.3} parent=0 // pred_fallthru
    _
  %v20 = vld [vmem:[%s0] sm:$0xff]
  %v21 = vld [vmem:[%s0 + $0x8] sm:$0xff]
  %v22 = vld [vmem:[%s1] sm:$0x1]
  %v24 = vlaneseq
  %v25 = vshrl.u32 %v24, 7
  %v26 = vsub.s32 0, %v25
  %v27 = vrot.slane %v22, %v26
  %v29 = vmul.f32 %v20, %v27
  %v30 = vmul.f32 %v21, %v27
  %v31 = vld [vmem:[%s2] sm:$0x1]
  %v33 = vlaneseq
  %v34 = vshrl.u32 %v33, 7
  %v35 = vsub.s32 0, %v34
  %v36 = vrot.slane %v31, %v35
  %v38 = vadd.f32 %v29, %v36
  %v39 = vadd.f32 %v30, %v36
  %v40 = vmul.f32 %v38, 0.5
  %v41 = vmul.f32 %v39, 0.5
  %v42 = vmul.f32 %v38, 0.70710677
  %v43 = vmul.f32 %v39, 0.70710677
  %v44 = verf.f32.pop %v42
  %v45 = verf.f32.pop %v43
  %v46 = vadd.f32 %v44, 1.0
  %v47 = vadd.f32 %v45, 1.0
  %v48 = vmul.f32 %v40, %v46
  %v49 = vmul.f32 %v41, %v47
  %v50 = vld [vmem:[%s3] sm:$0xff]
  %v51 = vld [vmem:[%s3 + $0x8] sm:$0xff]
  %v52 = vld [vmem:[%s3 + $0x10] sm:$0xff]
  %v53 = vld [vmem:[%s3 + $0x18] sm:$0xff]
  %v54 = vld [vmem:[%s3 + $0x20] sm:$0xff]
  %v55 = vld [vmem:[%s3 + $0x28] sm:$0xff]
  %v56 = vld [vmem:[%s3 + $0x30] sm:$0xff]
  %v57 = vld [vmem:[%s3 + $0x38] sm:$0xff]
  %v58 = vld [vmem:[%s3 + $0x40] sm:$0xff]
  %v59 = vld [vmem:[%s3 + $0x48] sm:$0xff]
  %v60 = vld [vmem:[%s3 + $0x50] sm:$0xff]
  %v61 = vld [vmem:[%s3 + $0x58] sm:$0xff]
  %v62 = vld [vmem:[%s3 + $0x60] sm:$0xff]
  %v63 = vld [vmem:[%s3 + $0x68] sm:$0xff]
  %v64 = vld [vmem:[%s3 + $0x70] sm:$0xff]
  %v65 = vld [vmem:[%s3 + $0x78] sm:$0xff]
  %v66 = vld [vmem:[%s4] sm:$0x1]
  %v68 = vlaneseq
  %v69 = vshrl.u32 %v68, 7
  %v70 = vsub.s32 0, %v69
  %v71 = vrot.slane %v66, %v70
  %73 = vmatprep.subr.mxu0 0.0
  %74 = vmatpush1.msra.mxu0 %v50
  %75 = vmatprep.subr.mxu0 0.0
  %76 = vmatpush1.msra.mxu0 %v51
  %77 = vmatprep.subr.mxu0 0.0
  %78 = vmatpush1.msra.mxu0 %v52
  %79 = vmatprep.subr.mxu0 0.0
  %80 = vmatpush1.msra.mxu0 %v53
  %81 = vmatprep.subr.mxu0 0.0
  %82 = vmatpush1.msra.mxu0 %v54
  %83 = vmatprep.subr.mxu0 0.0
  %84 = vmatpush1.msra.mxu0 %v55
  %85 = vmatprep.subr.mxu0 0.0
  %86 = vmatpush1.msra.mxu0 %v56
  %87 = vmatprep.subr.mxu0 0.0
  %88 = vmatpush1.msra.mxu0 %v57
  %89 = vmatprep.subr.mxu0 0.0
  %90 = vmatpush1.msra.mxu0 %v58
  %91 = vmatprep.subr.mxu0 0.0
  %92 = vmatpush1.msra.mxu0 %v59
  %93 = vmatprep.subr.mxu0 0.0
  %94 = vmatpush1.msra.mxu0 %v60
  %95 = vmatprep.subr.mxu0 0.0
  %96 = vmatpush1.msra.mxu0 %v61
  %97 = vmatprep.subr.mxu0 0.0
  %98 = vmatpush1.msra.mxu0 %v62
  %99 = vmatprep.subr.mxu0 0.0
  %100 = vmatpush1.msra.mxu0 %v63
  %101 = vmatprep.subr.mxu0 0.0
  %102 = vmatpush1.msra.mxu0 %v64
  %103 = vmatprep.subr.mxu0 0.0
  %104 = vmatpush1.msra.mxu0 %v65
  %105 = vmatprep.subr.mxu0 0.0
  %106 = vmatpush1.msra.mxu0 0.0
  %107 = vmatprep.subr.mxu0 0.0
  %108 = vmatpush1.msra.mxu0 0.0
  %109 = vmatprep.subr.mxu0 0.0
  %110 = vmatpush1.msra.mxu0 0.0
  %111 = vmatprep.subr.mxu0 0.0
  %112 = vmatpush1.msra.mxu0 0.0
  %113 = vmatprep.subr.mxu0 0.0
  %114 = vmatpush1.msra.mxu0 0.0
  %115 = vmatprep.subr.mxu0 0.0
  %116 = vmatpush1.msra.mxu0 0.0
  %117 = vmatprep.subr.mxu0 0.0
  %118 = vmatpush1.msra.mxu0 0.0
  %119 = vmatprep.subr.mxu0 0.0
  %120 = vmatpush1.msra.mxu0 0.0
  %121 = vmatprep.subr.mxu0 0.0
  %122 = vmatpush1.msra.mxu0 0.0
  %123 = vmatprep.subr.mxu0 0.0
  %124 = vmatpush1.msra.mxu0 0.0
  %125 = vmatprep.subr.mxu0 0.0
  %126 = vmatpush1.msra.mxu0 0.0
  %127 = vmatprep.subr.mxu0 0.0
  %128 = vmatpush1.msra.mxu0 0.0
  %129 = vmatprep.subr.mxu0 0.0
  %130 = vmatpush1.msra.mxu0 0.0
  %131 = vmatprep.subr.mxu0 0.0
  %132 = vmatpush1.msra.mxu0 0.0
  %133 = vmatprep.subr.mxu0 0.0
  %134 = vmatpush1.msra.mxu0 0.0
  %135 = vmatprep.subr.mxu0 0.0
  %136 = vmatpush1.msra.mxu0 0.0
  %137 = vmatprep.mubr.f32.mxu0 0.0
  %138 = vmatmul.mubr.f32.gmra.mrb[0].mxu0 %v48
  %v139 = vpop.f32.mrb[0].mxu0
  %v140 = vadd.f32 %v71, %v139
  %v141 = vpop.f32.mrb[0].mxu0
  %142 = vmatprep.mubr.f32.mxu0 0.0
  %143 = vmatmul.mubr.f32.gmra.mrb[0].mxu0 %v49
  %v144 = vpop.f32.mrb[0].mxu0
  %v145 = vadd.f32 %v71, %v144
  %v146 = vpop.f32.mrb[0].mxu0
  %147 = vdwg.mxu0
  %148 = vst [vmem:[%s5] sm:$0xff] %v140
  %149 = vst [vmem:[%s5 + $0x8] sm:$0xff] %v145
  // Predicated region
  $region22: #{mlp_forward.3} parent=0 // pred_check
    _
  $region23: #{mlp_forward.3} parent=0 // pred_check_branch
    %151 = sbr.rel (0) target = $region25
  $region24: #{mlp_forward.3} parent=0 // pred_region
    _
  $region25: #{mlp_forward.3} parent=0 // pred_fallthru
    _
  // Predicated region
  $region26: #{mlp_forward.3} parent=0 // pred_check
    _
  $region27: #{mlp_forward.3} parent=0 // pred_check_branch
    %153 = sbr.rel (0) target = $region29
  $region28: #{mlp_forward.3} parent=0 // pred_region
    _
  $region29: #{mlp_forward.3} parent=0 // pred_fallthru
    _

</llo_original>
